<compile_context>
chip_gen: v5e
topology: v5e:2x2
jax: 0.10.0
libtpu: 0.0.40
codegen_flags: <defaults>
</compile_context>

<pallas_src>
import jax
import jax.numpy as jnp
from jax import lax
from jax.experimental import pallas as pl
from jax.experimental.pallas import tpu as pltpu


def _round_up(x, m):
    return ((x + m - 1) // m) * m


def _kernel_svm_kernel(gamma_ref, bias_ref, x_ref, xt_ref, gyn_ref, w_ref,
                       o_ref, acc_ref, gxn_ref, *, precision):
    # gamma_ref, bias_ref : (1, 1) SMEM scalars
    # x_ref   : (tb, D) VMEM          xt_ref : (tn, D) VMEM
    # gyn_ref : (1, tn) VMEM  gamma * ||x_train||^2 (precomputed in wrapper)
    # w_ref   : (1, tn) VMEM  linear weight row (lane-dense)
    # o_ref   : (tb, 1) VMEM output (resident across the N grid axis)
    # acc_ref : (tb, 1) f32 scratch accumulator
    # gxn_ref : (tb, 1) f32 scratch, gamma * ||x||^2 hoisted once per B-tile
    j = pl.program_id(1)
    gamma = gamma_ref[0, 0]

    @pl.when(j == 0)
    def _():
        acc_ref[...] = jnp.zeros_like(acc_ref)
        xf = x_ref[...].astype(jnp.float32)
        gxn_ref[...] = gamma * jnp.sum(xf * xf, axis=-1, keepdims=True)

    # cross[b, n] = x[b] . x_train[n]  -- single-pass MXU matmul over D.
    cross = lax.dot_general(
        x_ref[...], xt_ref[...], (((1,), (1,)), ((), ())),
        preferred_element_type=jnp.float32,
        precision=precision)                         # (tb, tn)

    # arg = -gamma * ||x - y||^2 via the matmul identity; clamp at 0 to guard
    # against rounding pushing the squared distance slightly negative.
    arg = (2.0 * gamma) * cross - gxn_ref[...] - gyn_ref[...]
    arg = jnp.minimum(arg, 0.0)
    k = jnp.exp(arg)                                 # (tb, tn) RBF tile

    # Fused linear layer on the VPU: weighted lane reduce (no (tn,1) matmul).
    acc_ref[...] += jnp.sum(k * w_ref[...], axis=-1, keepdims=True)

    @pl.when(j == pl.num_programs(1) - 1)
    def _():
        o_ref[...] = (acc_ref[...] + bias_ref[0, 0]).astype(o_ref.dtype)


def kernel_svm_forward(x, x_train, gamma, weight, bias,
                       *, block_b=512, block_n=1024, precision=None):
    """x: (B, D), x_train: (N, D), gamma scalar, weight: (N, 1), bias scalar -> (B, 1).

    block_b / block_n are the batch / support-point tile sizes.  The VMEM
    budget (~4*tb*tn f32 temporaries + double-buffered input streams) is
    passed as vmem_limit_bytes, so the defaults fit v5e/v6e (128 MiB) and
    v7x (64 MiB) alike for small-to-moderate D.  `precision=None` uses the
    single-pass bf16 MXU path; pass lax.Precision.HIGH for tighter accuracy.
    """
    B, D = x.shape
    N, Dt = x_train.shape
    assert D == Dt, (x.shape, x_train.shape)
    assert weight.shape == (N, 1), weight.shape

    # Tile sizes: second-to-last dims multiples of 8 (sublane), N tile a
    # multiple of 128 (lane) unless it covers the full (padded) array.
    tb = min(block_b, _round_up(B, 8))
    tn = min(block_n, _round_up(N, 128))
    # v7x (2 TCs/chip): make sure the "parallel" B axis has >= 2 tiles so both
    # TensorCores get work when the batch is large enough to split.
    if B >= 16 and _round_up(B, tb) // tb < 2:
        tb = _round_up(pl.cdiv(B, 2), 8)
    Bp = _round_up(B, tb)
    Np = _round_up(N, tn)

    # Zero-pad: padded x_train rows carry zero weight (and zero norm), so they
    # contribute nothing to the output.
    if Bp != B:
        x = jnp.pad(x, ((0, Bp - B), (0, 0)))
    if Np != N:
        x_train = jnp.pad(x_train, ((0, Np - N), (0, 0)))
        weight = jnp.pad(weight, ((0, Np - N), (0, 0)))

    gamma_s = jnp.asarray(gamma, jnp.float32).reshape(1, 1)
    bias_s = jnp.asarray(bias, jnp.float32).reshape(1, 1)

    xtf = x_train.astype(jnp.float32)
    gyn = (jnp.asarray(gamma, jnp.float32)
           * jnp.sum(xtf * xtf, axis=-1)).reshape(1, Np)   # gamma*||x_train||^2
    w_row = jnp.transpose(weight.astype(jnp.float32))      # (1, Np), lane-dense

    grid = (Bp // tb, Np // tn)

    # VMEM budget: double-buffered streams + (tb,tn) f32 temporaries.
    vmem_bytes = 4 * (2 * tb * D + 2 * tn * D + 4 * tn + 4 * tb + 4 * tb * tn)
    vmem_limit = max(vmem_bytes + (4 << 20), 32 << 20)

    cost = pl.CostEstimate(
        flops=2 * Bp * Np * D + 7 * Bp * Np,   # distance matmul + elementwise/reduce
        transcendentals=Bp * Np,               # exp
        bytes_accessed=4 * (Bp * D + grid[0] * (Np * D + 2 * Np) + Bp),
    )

    import functools
    kernel = functools.partial(_kernel_svm_kernel, precision=precision)

    out = pl.pallas_call(
        kernel,
        out_shape=jax.ShapeDtypeStruct((Bp, 1), jnp.float32),
        grid=grid,
        in_specs=[
            pl.BlockSpec(memory_space=pltpu.MemorySpace.SMEM),   # gamma (1,1)
            pl.BlockSpec(memory_space=pltpu.MemorySpace.SMEM),   # bias  (1,1)
            pl.BlockSpec((tb, D), lambda i, j: (i, 0)),          # x tile
            pl.BlockSpec((tn, D), lambda i, j: (j, 0)),          # x_train tile
            pl.BlockSpec((1, tn), lambda i, j: (0, j)),          # gamma*||x_train||^2 row
            pl.BlockSpec((1, tn), lambda i, j: (0, j)),          # weight row
        ],
        out_specs=pl.BlockSpec((tb, 1), lambda i, j: (i, 0)),    # resident over N axis
        scratch_shapes=[
            pltpu.VMEM((tb, 1), jnp.float32),   # accumulator
            pltpu.VMEM((tb, 1), jnp.float32),   # hoisted gamma*||x||^2
        ],
        compiler_params=pltpu.CompilerParams(
            dimension_semantics=("parallel", "arbitrary"),
            vmem_limit_bytes=vmem_limit,
        ),
        cost_estimate=cost,
    )(gamma_s, bias_s, x, x_train, gyn, w_row)

    return out[:B]


def reference_forward(x, x_train, gamma, weight, bias):
    # Exact PyTorch semantics: broadcast-subtract, square, sum, exp, linear.
    diff = x[:, None, :] - x_train[None, :, :]
    k = jnp.exp(-gamma * jnp.sum(diff * diff, axis=2))
    return k @ weight + bias


if __name__ == "__main__":
    key = jax.random.PRNGKey(0)
    k_train, k_x, k_w, k_b = jax.random.split(key, 4)

    # Small shapes; N=200 with block_n=128 exercises both the N-axis
    # accumulation (2 tiles) and the zero-padding path.
    N, D, B = 200, 32, 8

    x_train = jax.random.normal(k_train, (N, D), dtype=jnp.float32)   # KernelSVM._train_data_x
    x = jax.random.normal(k_x, (B, D), dtype=jnp.float32)             # forward input
    gamma = jnp.float32(1.0 / D)                                      # trainable gamma parameter
    # nn.Linear(N, 1) parameters (synthetic deterministic init, not a checkpoint).
    weight = jax.random.normal(k_w, (N, 1), dtype=jnp.float32) * 0.1  # model.weight.t()
    bias = jax.random.normal(k_b, (), dtype=jnp.float32) * 0.1        # model.bias

    out = kernel_svm_forward(x, x_train, gamma, weight, bias,
                             block_b=8, block_n=128)
    out = jax.block_until_ready(out)

    ref = reference_forward(x, x_train, gamma, weight, bias)
    assert out.shape == (B, 1), out.shape
    # Single-pass bf16 MXU cross term -> small cancellation error on the
    # distance identity; tolerance reflects that (use precision=HIGH if tighter
    # accuracy is required).
    assert jnp.allclose(out, ref, atol=2e-3, rtol=2e-3), (out, ref)

    print("KERNEL_OK")
</pallas_src>

<mosaic_0001>
module attributes {stable_mosaic.version = 11 : i64} {
  func.func @_kernel_svm_kernel(%arg0: i32, %arg1: i32, %arg2: memref<1x1xf32, #tpu.memory_space<smem>>, %arg3: memref<1x1xf32, #tpu.memory_space<smem>>, %arg4: memref<8x32xf32, #tpu.memory_space<vmem>>, %arg5: memref<128x32xf32, #tpu.memory_space<vmem>>, %arg6: memref<1x128xf32, #tpu.memory_space<vmem>>, %arg7: memref<1x128xf32, #tpu.memory_space<vmem>>, %arg8: memref<8x1xf32, #tpu.memory_space<vmem>>, %arg9: memref<8x1xf32, #tpu.memory_space<vmem>>, %arg10: memref<8x1xf32, #tpu.memory_space<vmem>>) attributes {dimension_semantics = [#tpu.dimension_semantics<parallel>, #tpu.dimension_semantics<arbitrary>], iteration_bounds = array<i64: 1, 2>, scalar_prefetch = 0 : i64, scratch_operands = 2 : i64, tpu.core_type = #tpu.core_type<tc>, window_params = [{transform_indices = @transform_0, window_bounds = array<i64: 1, 1>}, {transform_indices = @transform_1, window_bounds = array<i64: 1, 1>}, {transform_indices = @transform_2, window_bounds = array<i64: 8, 32>}, {transform_indices = @transform_3, window_bounds = array<i64: 128, 32>}, {transform_indices = @transform_4, window_bounds = array<i64: 1, 128>}, {transform_indices = @transform_5, window_bounds = array<i64: 1, 128>}, {transform_indices = @transform_6, window_bounds = array<i64: 8, 1>}]} {
    %c0 = arith.constant 0 : index
    %c0_0 = arith.constant 0 : index
    %0 = memref.load %arg2[%c0, %c0_0] : memref<1x1xf32, #tpu.memory_space<smem>>
    %c0_i32 = arith.constant 0 : i32
    %1 = arith.cmpi eq, %arg1, %c0_i32 : i32
    %2 = arith.extui %1 : i1 to i32
    %c0_i32_1 = arith.constant 0 : i32
    %3 = arith.cmpi ne, %2, %c0_i32_1 : i32
    scf.if %3 {
      %cst_20 = arith.constant 0.000000e+00 : f32
      %30 = vector.broadcast %cst_20 : f32 to vector<8x1xf32>
      %c0_21 = arith.constant 0 : index
      %c0_22 = arith.constant 0 : index
      %31 = vector.load %arg9[%c0_21, %c0_22] : memref<8x1xf32, #tpu.memory_space<vmem>>, vector<8x1xf32>
      tpu.vector_store %arg9[%c0_21, %c0_22], %30 {strides = array<i32>} : memref<8x1xf32, #tpu.memory_space<vmem>>, vector<8x1xf32>,
      %c0_23 = arith.constant 0 : index
      %c0_24 = arith.constant 0 : index
      %32 = vector.load %arg4[%c0_23, %c0_24] : memref<8x32xf32, #tpu.memory_space<vmem>>, vector<8x32xf32>
      %33 = arith.mulf %32, %32 : vector<8x32xf32>
      %cst_25 = arith.constant dense<0.000000e+00> : vector<8xf32>
      %34 = vector.multi_reduction <add>, %33, %cst_25 [1] : vector<8x32xf32> to vector<8xf32>
      %35 = vector.shape_cast %34 : vector<8xf32> to vector<8x1xf32>
      %36 = vector.broadcast %0 : f32 to vector<8x1xf32>
      %37 = arith.mulf %36, %35 : vector<8x1xf32>
      %c0_26 = arith.constant 0 : index
      %c0_27 = arith.constant 0 : index
      %38 = vector.load %arg10[%c0_26, %c0_27] : memref<8x1xf32, #tpu.memory_space<vmem>>, vector<8x1xf32>
      tpu.vector_store %arg10[%c0_26, %c0_27], %37 {strides = array<i32>} : memref<8x1xf32, #tpu.memory_space<vmem>>, vector<8x1xf32>,
    } else {
    }
    %c0_2 = arith.constant 0 : index
    %c0_3 = arith.constant 0 : index
    %4 = vector.load %arg4[%c0_2, %c0_3] : memref<8x32xf32, #tpu.memory_space<vmem>>, vector<8x32xf32>
    %c0_4 = arith.constant 0 : index
    %c0_5 = arith.constant 0 : index
    %5 = vector.load %arg5[%c0_4, %c0_5] : memref<128x32xf32, #tpu.memory_space<vmem>>, vector<128x32xf32>
    %cst = arith.constant dense<0.000000e+00> : vector<8x128xf32>
    %6 = tpu.matmul %4, %5, %cst {dimension_numbers = #tpu.dot_dimension_numbers<[1], [1], [0], [0], [0, 0, 1, 0], [], []>} : vector<8x32xf32>, vector<128x32xf32>, vector<8x128xf32> -> vector<8x128xf32>
    %cst_6 = arith.constant 2.000000e+00 : f32
    %7 = arith.mulf %cst_6, %0 : f32
    %8 = vector.broadcast %7 : f32 to vector<8x128xf32>
    %9 = arith.mulf %8, %6 : vector<8x128xf32>
    %c0_7 = arith.constant 0 : index
    %c0_8 = arith.constant 0 : index
    %10 = vector.load %arg10[%c0_7, %c0_8] : memref<8x1xf32, #tpu.memory_space<vmem>>, vector<8x1xf32>
    %11 = vector.broadcast %10 : vector<8x1xf32> to vector<8x128xf32>
    %12 = arith.subf %9, %11 : vector<8x128xf32>
    %c0_9 = arith.constant 0 : index
    %c0_10 = arith.constant 0 : index
    %13 = vector.load %arg6[%c0_9, %c0_10] : memref<1x128xf32, #tpu.memory_space<vmem>>, vector<1x128xf32>
    %14 = vector.broadcast %13 : vector<1x128xf32> to vector<8x128xf32>
    %15 = arith.subf %12, %14 : vector<8x128xf32>
    %cst_11 = arith.constant 0.000000e+00 : f32
    %16 = vector.broadcast %cst_11 : f32 to vector<8x128xf32>
    %17 = arith.minimumf %15, %16 : vector<8x128xf32>
    %18 = math.exp %17 : vector<8x128xf32>
    %c0_12 = arith.constant 0 : index
    %c0_13 = arith.constant 0 : index
    %19 = vector.load %arg9[%c0_12, %c0_13] : memref<8x1xf32, #tpu.memory_space<vmem>>, vector<8x1xf32>
    %c0_14 = arith.constant 0 : index
    %c0_15 = arith.constant 0 : index
    %20 = vector.load %arg7[%c0_14, %c0_15] : memref<1x128xf32, #tpu.memory_space<vmem>>, vector<1x128xf32>
    %21 = vector.broadcast %20 : vector<1x128xf32> to vector<8x128xf32>
    %22 = arith.mulf %18, %21 : vector<8x128xf32>
    %cst_16 = arith.constant dense<0.000000e+00> : vector<8xf32>
    %23 = vector.multi_reduction <add>, %22, %cst_16 [1] : vector<8x128xf32> to vector<8xf32>
    %24 = vector.shape_cast %23 : vector<8xf32> to vector<8x1xf32>
    %25 = arith.addf %19, %24 : vector<8x1xf32>
    %c0_17 = arith.constant 0 : index
    %c0_18 = arith.constant 0 : index
    %26 = vector.load %arg9[%c0_17, %c0_18] : memref<8x1xf32, #tpu.memory_space<vmem>>, vector<8x1xf32>
    tpu.vector_store %arg9[%c0_17, %c0_18], %25 {strides = array<i32>} : memref<8x1xf32, #tpu.memory_space<vmem>>, vector<8x1xf32>,
    %c1_i32 = arith.constant 1 : i32
    %27 = arith.cmpi eq, %arg1, %c1_i32 : i32
    %28 = arith.extui %27 : i1 to i32
    %c0_i32_19 = arith.constant 0 : i32
    %29 = arith.cmpi ne, %28, %c0_i32_19 : i32
    scf.if %29 {
      %c0_20 = arith.constant 0 : index
      %c0_21 = arith.constant 0 : index
      %30 = vector.load %arg9[%c0_20, %c0_21] : memref<8x1xf32, #tpu.memory_space<vmem>>, vector<8x1xf32>
      %c0_22 = arith.constant 0 : index
      %c0_23 = arith.constant 0 : index
      %31 = memref.load %arg3[%c0_22, %c0_23] : memref<1x1xf32, #tpu.memory_space<smem>>
      %32 = vector.broadcast %31 : f32 to vector<8x1xf32>
      %33 = arith.addf %30, %32 : vector<8x1xf32>
      %c0_24 = arith.constant 0 : index
      %c0_25 = arith.constant 0 : index
      %34 = vector.load %arg8[%c0_24, %c0_25] : memref<8x1xf32, #tpu.memory_space<vmem>>, vector<8x1xf32>
      tpu.vector_store %arg8[%c0_24, %c0_25], %33 {strides = array<i32>} : memref<8x1xf32, #tpu.memory_space<vmem>>, vector<8x1xf32>,
    } else {
    }
    return
  }
  func.func @transform_0(%arg0: i32, %arg1: i32) -> (i32, i32) {
    %c0_i32 = arith.constant 0 : i32
    %c0_i32_0 = arith.constant 0 : i32
    %c0_i32_1 = arith.constant 0 : i32
    return %c0_i32, %c0_i32_0 : i32, i32
  }
  func.func @transform_1(%arg0: i32, %arg1: i32) -> (i32, i32) {
    %c0_i32 = arith.constant 0 : i32
    %c0_i32_0 = arith.constant 0 : i32
    %c0_i32_1 = arith.constant 0 : i32
    return %c0_i32, %c0_i32_0 : i32, i32
  }
  func.func @transform_2(%arg0: i32, %arg1: i32) -> (i32, i32) {
    %c0_i32 = arith.constant 0 : i32
    %c0_i32_0 = arith.constant 0 : i32
    return %arg0, %c0_i32 : i32, i32
  }
  func.func @transform_3(%arg0: i32, %arg1: i32) -> (i32, i32) {
    %c0_i32 = arith.constant 0 : i32
    %c0_i32_0 = arith.constant 0 : i32
    return %arg1, %c0_i32 : i32, i32
  }
  func.func @transform_4(%arg0: i32, %arg1: i32) -> (i32, i32) {
    %c0_i32 = arith.constant 0 : i32
    %c0_i32_0 = arith.constant 0 : i32
    return %c0_i32, %arg1 : i32, i32
  }
  func.func @transform_5(%arg0: i32, %arg1: i32) -> (i32, i32) {
    %c0_i32 = arith.constant 0 : i32
    %c0_i32_0 = arith.constant 0 : i32
    return %c0_i32, %arg1 : i32, i32
  }
  func.func @transform_6(%arg0: i32, %arg1: i32) -> (i32, i32) {
    %c0_i32 = arith.constant 0 : i32
    %c0_i32_0 = arith.constant 0 : i32
    return %arg0, %c0_i32 : i32, i32
  }
}

</mosaic_0001>

<llo_original>
// kernel: tpu_custom_call.1
$region0: #{tpu_custom_call.1}
  #allocation0 [shape = 'u32[]', space=smem, size = 0x4, offset = 0x4, fixed_abs, tag = 'smem constant byte address 0x4 - core index']
  #allocation1 [shape = 'u32[72,128]{1,0:T(1,128)}', space=vmem, size = 0x9000, scoped, tag = 'internal scratch']
  #allocation2 [shape = 'f32[8,1]{1,0:T(8,128)}', space=vmem, size = 0x1000, scoped, tag = 'scratch operand']
  #allocation3 [shape = 'f32[8,1]{1,0:T(8,128)}', space=vmem, size = 0x1000, scoped, tag = 'scratch operand']
  #allocation4 [shape = 'f32[1,1]{1,0:T(1,128)S(6)}', space=smem, size = 0x200, scoped, tag = 'scoped memory for tpu_custom_call.1']
  #allocation5 [shape = 'f32[1,1]{1,0:T(1,128)S(6)}', space=smem, size = 0x200, scoped, tag = 'scoped memory for tpu_custom_call.1']
  %s0 = inlined_call_operand.<no memory space> [shape: f32[1,1], index: 0, kind: input, shape index: {}]
  %s1 = inlined_call_operand.<no memory space> [shape: f32[1,1], index: 1, kind: input, shape index: {}]
  %s2 = inlined_call_operand.vmem [shape: f32[8,32], index: 2, kind: input, shape index: {}]
  %s3 = inlined_call_operand.vmem [shape: f32[256,32], index: 3, kind: input, shape index: {}]
  %s4 = inlined_call_operand.vmem [shape: f32[1,256], index: 4, kind: input, shape index: {}]
  %s5 = inlined_call_operand.vmem [shape: f32[1,256], index: 5, kind: input, shape index: {}]
  %s6 = inlined_call_operand.vmem [shape: f32[8,1], index: 6, kind: output, shape index: {}]
  %s7 = sld [smem:[#allocation0]]
  $region65: #{tpu_custom_call.1} parent=0
    _
  %s9 = ssub.s32 1, %s7
  %s10 = scalar_select 0, %s9, %s7
  %11 = sst [smem:[#allocation4]] %s0
  %12 = sst [smem:[#allocation5]] %s1
  loop: start=0, step=1, limit=4
  $region2: #{tpu_custom_call.1} parent=0 // loop_pre_header
    _
  $region3: #{tpu_custom_call.1} parent=0 // loop_header
    %s14 = sphi 0, %s18
    %p15 = scmp.ge.s32.totalorder %s14, 4
    %s21 = sphi 0, %s33
    %s22 = sphi 0, %s29
    %s23 = sphi 0, %s21
    %s24 = sphi 0, %s22
    %s25 = sphi 0, %s23
    %s26 = sphi 0, %s24
    %s34 = sphi 0, %s34
    %s36 = sphi 0, %s34
    %s37 = sphi 0, %s36
    %s51 = sphi 0, %s37
    %s55 = sphi 0, %s55
    %s57 = sphi 0, %s55
    %s58 = sphi 0, %s57
    %s72 = sphi 0, %s58
    %s78 = sphi 0, %s80
    %s81 = sphi 0, %s78
    %s82 = sphi 0, %s81
    %s98 = sphi 0, %s82
    %s104 = sphi 0, %s106
    %s107 = sphi 0, %s104
    %s108 = sphi 0, %s107
    %s124 = sphi 0, %s108
    %s130 = sphi 0, %s132
    %s133 = sphi 0, %s130
    %s134 = sphi 0, %s133
    %s150 = sphi 0, %s134
    %s156 = sphi 0, %s158
    %s159 = sphi 0, %s156
    %s160 = sphi 0, %s159
    %s176 = sphi 0, %s160
    %s182 = sphi 0, %s184
    %s185 = sphi 0, %s182
    %s186 = sphi 0, %s185
    %s202 = sphi 0, %s186
  $region4: #{tpu_custom_call.1} parent=0 // loop_header_branch
    %17 = sbr.rel (%p15) target = $region8
  $region5: #{tpu_custom_call.1} parent=0 // loop_body
    %s19 = ssub.s32 %s14, 1
    %s20 = ssub.s32 %s14, 2
    %s27 = sadd.s32 1, %s22
    %p28 = scmp.ge.s32.totalorder %s27, 2
    %s29 = scalar_select %p28, 0, %s27
    %s30 = sadd.s32 1, %s21
    %s31 = scalar_select %p28, %s30, %s21
    %p32 = scmp.ge.s32.totalorder %s31, 1
    %s33 = scalar_select %p32, 0, %s31
    %s35 = sadd.s32 %s34, 1
    %p38 = scmp.eq.s32.totalorder %s14, 1
    %p39 = scmp.ne.s32.totalorder %s34, %s36
    %p40 = scmp.eq.s32.totalorder %s14, 0
    %p41 = por %p39, %p40
    %p42 = scmp.ne.s32.totalorder %s34, %s36
    %p43 = scmp.eq.s32.totalorder %s19, 1
    %p44 = por %p42, %p43
    %p45 = scmp.ne.s32.totalorder %s36, %s37
    %p46 = scmp.eq.s32.totalorder %s19, 0
    %p47 = por %p45, %p46
    %p48 = scmp.ne.s32.totalorder %s36, %s37
    %p49 = scmp.eq.s32.totalorder %s20, 1
    %p50 = por %p48, %p49
    %p52 = scmp.ne.s32.totalorder %s37, %s51
    %p53 = scmp.eq.s32.totalorder %s20, 0
    %p54 = por %p52, %p53
    %s56 = sadd.s32 %s55, 1
    %p59 = scmp.eq.s32.totalorder %s14, 1
    %p60 = scmp.ne.s32.totalorder %s55, %s57
    %p61 = scmp.eq.s32.totalorder %s14, 0
    %p62 = por %p60, %p61
    %p63 = scmp.ne.s32.totalorder %s55, %s57
    %p64 = scmp.eq.s32.totalorder %s19, 1
    %p65 = por %p63, %p64
    %p66 = scmp.ne.s32.totalorder %s57, %s58
    %p67 = scmp.eq.s32.totalorder %s19, 0
    %p68 = por %p66, %p67
    %p69 = scmp.ne.s32.totalorder %s57, %s58
    %p70 = scmp.eq.s32.totalorder %s20, 1
    %p71 = por %p69, %p70
    %p73 = scmp.ne.s32.totalorder %s58, %s72
    %p74 = scmp.eq.s32.totalorder %s20, 0
    %p75 = por %p73, %p74
    %s76 = ssub.s32 %s21, %s33
    %p77 = scmp.eq.s32.totalorder %s76, 0
    %s79 = sadd.s32 %s78, 1
    %s80 = scalar_select %p77, %s78, %s79
    %p83 = pneg %p77
    %p84 = scmp.eq.s32.totalorder %s14, 1
    %p85 = por %p83, %p84
    %p86 = scmp.ne.s32.totalorder %s78, %s81
    %p87 = scmp.eq.s32.totalorder %s14, 0
    %p88 = por %p86, %p87
    %p89 = scmp.ne.s32.totalorder %s78, %s81
    %p90 = scmp.eq.s32.totalorder %s19, 1
    %p91 = por %p89, %p90
    %p92 = scmp.ne.s32.totalorder %s81, %s82
    %p93 = scmp.eq.s32.totalorder %s19, 0
    %p94 = por %p92, %p93
    %p95 = scmp.ne.s32.totalorder %s81, %s82
    %p96 = scmp.eq.s32.totalorder %s20, 1
    %p97 = por %p95, %p96
    %p99 = scmp.ne.s32.totalorder %s82, %s98
    %p100 = scmp.eq.s32.totalorder %s20, 0
    %p101 = por %p99, %p100
    %s102 = ssub.s32 %s22, %s29
    %p103 = scmp.eq.s32.totalorder %s102, 0
    %s105 = sadd.s32 %s104, 1
    %s106 = scalar_select %p103, %s104, %s105
    %p109 = pneg %p103
    %p110 = scmp.eq.s32.totalorder %s14, 1
    %p111 = por %p109, %p110
    %p112 = scmp.ne.s32.totalorder %s104, %s107
    %p113 = scmp.eq.s32.totalorder %s14, 0
    %p114 = por %p112, %p113
    %p115 = scmp.ne.s32.totalorder %s104, %s107
    %p116 = scmp.eq.s32.totalorder %s19, 1
    %p117 = por %p115, %p116
    %p118 = scmp.ne.s32.totalorder %s107, %s108
    %p119 = scmp.eq.s32.totalorder %s19, 0
    %p120 = por %p118, %p119
    %p121 = scmp.ne.s32.totalorder %s107, %s108
    %p122 = scmp.eq.s32.totalorder %s20, 1
    %p123 = por %p121, %p122
    %p125 = scmp.ne.s32.totalorder %s108, %s124
    %p126 = scmp.eq.s32.totalorder %s20, 0
    %p127 = por %p125, %p126
    %s128 = ssub.s32 %s22, %s29
    %p129 = scmp.eq.s32.totalorder %s128, 0
    %s131 = sadd.s32 %s130, 1
    %s132 = scalar_select %p129, %s130, %s131
    %p135 = pneg %p129
    %p136 = scmp.eq.s32.totalorder %s14, 1
    %p137 = por %p135, %p136
    %p138 = scmp.ne.s32.totalorder %s130, %s133
    %p139 = scmp.eq.s32.totalorder %s14, 0
    %p140 = por %p138, %p139
    %p141 = scmp.ne.s32.totalorder %s130, %s133
    %p142 = scmp.eq.s32.totalorder %s19, 1
    %p143 = por %p141, %p142
    %p144 = scmp.ne.s32.totalorder %s133, %s134
    %p145 = scmp.eq.s32.totalorder %s19, 0
    %p146 = por %p144, %p145
    %p147 = scmp.ne.s32.totalorder %s133, %s134
    %p148 = scmp.eq.s32.totalorder %s20, 1
    %p149 = por %p147, %p148
    %p151 = scmp.ne.s32.totalorder %s134, %s150
    %p152 = scmp.eq.s32.totalorder %s20, 0
    %p153 = por %p151, %p152
    %s154 = ssub.s32 %s22, %s29
    %p155 = scmp.eq.s32.totalorder %s154, 0
    %s157 = sadd.s32 %s156, 1
    %s158 = scalar_select %p155, %s156, %s157
    %p161 = pneg %p155
    %p162 = scmp.eq.s32.totalorder %s14, 1
    %p163 = por %p161, %p162
    %p164 = scmp.ne.s32.totalorder %s156, %s159
    %p165 = scmp.eq.s32.totalorder %s14, 0
    %p166 = por %p164, %p165
    %p167 = scmp.ne.s32.totalorder %s156, %s159
    %p168 = scmp.eq.s32.totalorder %s19, 1
    %p169 = por %p167, %p168
    %p170 = scmp.ne.s32.totalorder %s159, %s160
    %p171 = scmp.eq.s32.totalorder %s19, 0
    %p172 = por %p170, %p171
    %p173 = scmp.ne.s32.totalorder %s159, %s160
    %p174 = scmp.eq.s32.totalorder %s20, 1
    %p175 = por %p173, %p174
    %p177 = scmp.ne.s32.totalorder %s160, %s176
    %p178 = scmp.eq.s32.totalorder %s20, 0
    %p179 = por %p177, %p178
    %s180 = ssub.s32 %s21, %s33
    %p181 = scmp.eq.s32.totalorder %s180, 0
    %s183 = sadd.s32 %s182, 1
    %s184 = scalar_select %p181, %s182, %s183
    %p187 = pneg %p181
    %p188 = scmp.eq.s32.totalorder %s14, 1
    %p189 = por %p187, %p188
    %p190 = scmp.ne.s32.totalorder %s182, %s185
    %p191 = scmp.eq.s32.totalorder %s14, 0
    %p192 = por %p190, %p191
    %p193 = scmp.ne.s32.totalorder %s182, %s185
    %p194 = scmp.eq.s32.totalorder %s19, 1
    %p195 = por %p193, %p194
    %p196 = scmp.ne.s32.totalorder %s185, %s186
    %p197 = scmp.eq.s32.totalorder %s19, 0
    %p198 = por %p196, %p197
    %p199 = scmp.ne.s32.totalorder %s185, %s186
    %p200 = scmp.eq.s32.totalorder %s20, 1
    %p201 = por %p199, %p200
    %p203 = scmp.ne.s32.totalorder %s186, %s202
    %p204 = scmp.eq.s32.totalorder %s20, 0
    %p205 = por %p203, %p204
    %p206 = scmp.le.s32.totalorder 1, %s14
    %p207 = scmp.lt.s32.totalorder %s14, 3
    %p208 = pnand %p206, %p207
    %p209 = pneg %p208
    // Predicated region
    $region9: #{tpu_custom_call.1} parent=5 // pred_check
      _
    $region10: #{tpu_custom_call.1} parent=5 // pred_check_branch
      %211 = sbr.rel (%p208) target = $region12
    $region11: #{tpu_custom_call.1} parent=5 // pred_region
      %s212 = ssub.s32 %s14, 1
      // Predicated region
      $region13: #{tpu_custom_call.1} parent=11 // pred_check
        %p213 = pneg %p47
      $region14: #{tpu_custom_call.1} parent=11 // pred_check_branch
        %215 = sbr.rel (%p213) target = $region16
      $region15: #{tpu_custom_call.1} parent=11 // pred_region
        _
      $region16: #{tpu_custom_call.1} parent=11 // pred_fallthru
        _
      // Predicated region
      $region17: #{tpu_custom_call.1} parent=11 // pred_check
        %p216 = pneg %p68
      $region18: #{tpu_custom_call.1} parent=11 // pred_check_branch
        %218 = sbr.rel (%p216) target = $region20
      $region19: #{tpu_custom_call.1} parent=11 // pred_region
        _
      $region20: #{tpu_custom_call.1} parent=11 // pred_fallthru
        _
      // Predicated region
      $region21: #{tpu_custom_call.1} parent=11 // pred_check
        %p219 = pneg %p94
      $region22: #{tpu_custom_call.1} parent=11 // pred_check_branch
        %221 = sbr.rel (%p219) target = $region24
      $region23: #{tpu_custom_call.1} parent=11 // pred_region
        %p222 = scmp.lt.s32.totalorder %s23, 0
        %s223 = scalar_select %p222, %s23, 0
        %s224 = smul.addr %s223, 8
        %s225 = scalar_lea.vmem %s2, %s224
      $region24: #{tpu_custom_call.1} parent=11 // pred_fallthru
        _
    $region12: #{tpu_custom_call.1} parent=5 // pred_fallthru
      _
    %p226 = scmp.lt.s32.totalorder %s14, 2
    // Predicated region
    $region25: #{tpu_custom_call.1} parent=5 // pred_check
      %p227 = pneg %p226
    $region26: #{tpu_custom_call.1} parent=5 // pred_check_branch
      %229 = sbr.rel (%p227) target = $region28
    $region27: #{tpu_custom_call.1} parent=5 // pred_region
      // Predicated region
      $region29: #{tpu_custom_call.1} parent=27 // pred_check
        %p230 = pneg %p114
      $region30: #{tpu_custom_call.1} parent=27 // pred_check_branch
        %232 = sbr.rel (%p230) target = $region32
      $region31: #{tpu_custom_call.1} parent=27 // pred_region
        %s233 = smul.u32 16, %s22
        %p234 = scmp.lt.s32.totalorder %s233, 31
        %s235 = scalar_select %p234, %s233, 31
        %s236 = smul.addr %s235, 8
        %s237 = scalar_lea.vmem %s3, %s236
        %s238 = smul.u32 16, %s22
      $region32: #{tpu_custom_call.1} parent=27 // pred_fallthru
        _
      // Predicated region
      $region33: #{tpu_custom_call.1} parent=27 // pred_check
        %p239 = pneg %p140
      $region34: #{tpu_custom_call.1} parent=27 // pred_check_branch
        %241 = sbr.rel (%p239) target = $region36
      $region35: #{tpu_custom_call.1} parent=27 // pred_region
        %p242 = scmp.lt.s32.totalorder %s22, 1
        %s243 = scalar_select %p242, %s22, 1
        %s244 = scalar_lea.vmem %s4, %s243
      $region36: #{tpu_custom_call.1} parent=27 // pred_fallthru
        _
      // Predicated region
      $region37: #{tpu_custom_call.1} parent=27 // pred_check
        %p245 = pneg %p166
      $region38: #{tpu_custom_call.1} parent=27 // pred_check_branch
        %247 = sbr.rel (%p245) target = $region40
      $region39: #{tpu_custom_call.1} parent=27 // pred_region
        %p248 = scmp.lt.s32.totalorder %s22, 1
        %s249 = scalar_select %p248, %s22, 1
        %s250 = scalar_lea.vmem %s5, %s249
      $region40: #{tpu_custom_call.1} parent=27 // pred_fallthru
        _
    $region28: #{tpu_custom_call.1} parent=5 // pred_fallthru
      _
    %p251 = scmp.le.s32.totalorder 1, %s14
    %p252 = scmp.lt.s32.totalorder %s14, 3
    %p253 = pnand %p251, %p252
    %p254 = pneg %p253
    // Predicated region
    $region41: #{tpu_custom_call.1} parent=5 // pred_check
      _
    $region42: #{tpu_custom_call.1} parent=5 // pred_check_branch
      %256 = sbr.rel (%p253) target = $region44
    $region43: #{tpu_custom_call.1} parent=5 // pred_region
      %s257 = ssub.s32 %s14, 1
      %p258 = pneg %p47
      %p259 = pneg %p44
      %p260 = pneg %p68
      %p261 = pneg %p65
      %p262 = scmp.lt.s32.totalorder %s23, 0
      %s263 = scalar_select %p262, %s23, 0
      %s264 = smul.addr %s263, 8
      %s265 = scalar_lea.vmem %s2, %s264
      %p266 = pneg %p94
      %p267 = pneg %p91
      %s268 = smul.u32 16, %s24
      %p269 = scmp.lt.s32.totalorder %s268, 31
      %s270 = scalar_select %p269, %s268, 31
      %s271 = smul.addr %s270, 8
      %s272 = scalar_lea.vmem %s3, %s271
      %p273 = pneg %p120
      %p274 = pneg %p117
      %p275 = scmp.lt.s32.totalorder %s24, 1
      %s276 = scalar_select %p275, %s24, 1
      %s277 = scalar_lea.vmem %s4, %s276
      %p278 = pneg %p146
      %p279 = pneg %p143
      %p280 = scmp.lt.s32.totalorder %s24, 1
      %s281 = scalar_select %p280, %s24, 1
      %s282 = scalar_lea.vmem %s5, %s281
      %p283 = pneg %p172
      %p284 = pneg %p169
      %p285 = pneg %p198
      %p286 = pneg %p195
      %p287 = scmp.lt.s32.totalorder %s23, 0
      %s288 = scalar_select %p287, %s23, 0
      %s289 = smul.addr %s288, 8
      %s290 = scalar_lea.vmem %s6, %s289
      %p291 = scmp.lt.s32.totalorder %s23, 0
      %s292 = scalar_select %p291, %s23, 0
      %s293 = smul.addr %s292, 8
      %s294 = scalar_lea.vmem %s2, %s293
      %s295 = smul.u32 16, %s24
      %p296 = scmp.lt.s32.totalorder %s295, 31
      %s297 = scalar_select %p296, %s295, 31
      %s298 = smul.addr %s297, 8
      %s299 = scalar_lea.vmem %s3, %s298
      %s300 = smul.u32 16, %s24
      %p301 = scmp.lt.s32.totalorder %s24, 1
      %s302 = scalar_select %p301, %s24, 1
      %s303 = scalar_lea.vmem %s4, %s302
      %p304 = scmp.lt.s32.totalorder %s24, 1
      %s305 = scalar_select %p304, %s24, 1
      %s306 = scalar_lea.vmem %s5, %s305
      %p307 = scmp.lt.s32.totalorder %s23, 0
      %s308 = scalar_select %p307, %s23, 0
      %s309 = smul.addr %s308, 8
      %s310 = scalar_lea.vmem %s6, %s309
      %s311 = sld [smem:[#allocation4]]
      %p312 = scmp.eq.s32.totalorder %s24, 0
      // Predicated region
      $region45: #{tpu_custom_call.1} parent=43 // pred_check
        %p313 = pneg %p312
      $region46: #{tpu_custom_call.1} parent=43 // pred_check_branch
        %315 = sbr.rel (%p313) target = $region48
      $region47: #{tpu_custom_call.1} parent=43 // pred_region
        %vm316 = vcmask 7168
        %317 = vst.msk [vmem:[#allocation2] sm:$0xff] %vm316, 0.0
        %v318 = vld [vmem:[%s294] sm:$0xff]
        %v319 = vmul.f32 %v318, %v318
        %vm320 = vcmask 261120
        %v321 = vsel %vm320, %v319, 0.0
        %322 = vadd.xlane.f32.xlu0 %v321
        %v323 = vpop.xlane.xlu0 %322
        %v324 = vstv %s311
        %v325 = vmul.f32 %v324, %v323
        %326 = vst.msk [vmem:[#allocation3] sm:$0xff] %vm316, %v325
      $region48: #{tpu_custom_call.1} parent=43 // pred_fallthru
        _
      %v327 = vld [vmem:[%s294] sm:$0xff]
      %v328 = vld [vmem:[%s299] sm:$0xff]
      %v329 = vld [vmem:[%s299 + $0x8] sm:$0xff]
      %v330 = vld [vmem:[%s299 + $0x10] sm:$0xff]
      %v331 = vld [vmem:[%s299 + $0x18] sm:$0xff]
      %v332 = vld [vmem:[%s299 + $0x20] sm:$0xff]
      %v333 = vld [vmem:[%s299 + $0x28] sm:$0xff]
      %v334 = vld [vmem:[%s299 + $0x30] sm:$0xff]
      %v335 = vld [vmem:[%s299 + $0x38] sm:$0xff]
      %v336 = vld [vmem:[%s299 + $0x40] sm:$0xff]
      %v337 = vld [vmem:[%s299 + $0x48] sm:$0xff]
      %v338 = vld [vmem:[%s299 + $0x50] sm:$0xff]
      %v339 = vld [vmem:[%s299 + $0x58] sm:$0xff]
      %v340 = vld [vmem:[%s299 + $0x60] sm:$0xff]
      %v341 = vld [vmem:[%s299 + $0x68] sm:$0xff]
      %v342 = vld [vmem:[%s299 + $0x70] sm:$0xff]
      %v343 = vld [vmem:[%s299 + $0x78] sm:$0xff]
      %vm344 = vcmask 261120
      %v346 = vsel %vm344, %v327, 0
      %v349 = vsel %vm344, %v328, 0
      %v352 = vsel %vm344, %v329, 0
      %v355 = vsel %vm344, %v330, 0
      %v358 = vsel %vm344, %v331, 0
      %v361 = vsel %vm344, %v332, 0
      %v364 = vsel %vm344, %v333, 0
      %v367 = vsel %vm344, %v334, 0
      %v370 = vsel %vm344, %v335, 0
      %v373 = vsel %vm344, %v336, 0
      %v376 = vsel %vm344, %v337, 0
      %v379 = vsel %vm344, %v338, 0
      %v382 = vsel %vm344, %v339, 0
      %v385 = vsel %vm344, %v340, 0
      %v388 = vsel %vm344, %v341, 0
      %v391 = vsel %vm344, %v342, 0
      %v394 = vsel %vm344, %v343, 0
      %396 = vmatpush.xpose.msra.mxu0 %v394
      %397 = vmatpush.xpose.msra.mxu0 %v391
      %398 = vmatpush.xpose.msra.mxu0 %v388
      %399 = vmatpush.xpose.msra.mxu0 %v385
      %400 = vmatpush.xpose.msra.mxu0 %v382
      %401 = vmatpush.xpose.msra.mxu0 %v379
      %402 = vmatpush.xpose.msra.mxu0 %v376
      %403 = vmatpush.xpose.msra.mxu0 %v373
      %404 = vmatpush.xpose.msra.mxu0 %v370
      %405 = vmatpush.xpose.msra.mxu0 %v367
      %406 = vmatpush.xpose.msra.mxu0 %v364
      %407 = vmatpush.xpose.msra.mxu0 %v361
      %408 = vmatpush.xpose.msra.mxu0 %v358
      %409 = vmatpush.xpose.msra.mxu0 %v355
      %410 = vmatpush.xpose.msra.mxu0 %v352
      %411 = vmatpush.xpose.msra.mxu0 %v349
      %412 = vmatmul.f32.gmra.mxu0 %v346
      %v413 = vpop.f32.mrf.mxu0
      %v414 = vadd.f32 0.0, %v413
      %415 = vdwg.mxu0
      %s416 = smul.f32 %s311, 2.0
      %v417 = vstv %s416
      %v418 = vmul.f32 %v417, %v414
      %v419 = vld [vmem:[#allocation3] sm:$0xff]
      %421 = vset.pattern.permute.xlu0 0
      %422 = vperm.xlu0 %421, %v419
      %v423 = vpop.permute.xlu0 %422
      %v425 = vsub.f32 %v418, %v423
      %v426 = vld [vmem:[%s303] sm:$0x1]
      %v428 = vperm.slane %v426, 0
      %v430 = vsub.f32 %v425, %v428
      %v431 = vmin.f32 %v430, 0.0
      %v432 = vmul.f32 %v431, 1.442695
      %v433 = vpow.pop %v432
      %v434 = vld [vmem:[#allocation2] sm:$0xff]
      %v435 = vld [vmem:[%s306] sm:$0x1]
      %v437 = vperm.slane %v435, 0
      %v439 = vmul.f32 %v433, %v437
      %440 = vadd.xlane.f32.xlu0 %v439
      %v441 = vpop.xlane.xlu0 %440
      %v442 = vadd.f32 %v434, %v441
      %vm443 = vcmask 7168
      %444 = vst.msk [vmem:[#allocation2] sm:$0xff] %vm443, %v442
      %p445 = scmp.eq.s32.totalorder %s24, 1
      // Predicated region
      $region49: #{tpu_custom_call.1} parent=43 // pred_check
        %p446 = pneg %p445
      $region50: #{tpu_custom_call.1} parent=43 // pred_check_branch
        %448 = sbr.rel (%p446) target = $region52
      $region51: #{tpu_custom_call.1} parent=43 // pred_region
        %v449 = vld [vmem:[#allocation2] sm:$0xff]
        %s450 = sld [smem:[#allocation5]]
        %v451 = vstv %s450
        %v452 = vadd.f32 %v449, %v451
        %453 = vst.msk [vmem:[%s310] sm:$0xff] %vm443, %v452
      $region52: #{tpu_custom_call.1} parent=43 // pred_fallthru
        _
      %p454 = scmp.lt.s32.totalorder %s23, 0
      %s455 = scalar_select %p454, %s23, 0
      %s456 = smul.addr %s455, 8
      %s457 = scalar_lea.vmem %s6, %s456
      // Predicated region
      $region53: #{tpu_custom_call.1} parent=43 // pred_check
        %p458 = pneg %p195
      $region54: #{tpu_custom_call.1} parent=43 // pred_check_branch
        %460 = sbr.rel (%p458) target = $region56
      $region55: #{tpu_custom_call.1} parent=43 // pred_region
        _
      $region56: #{tpu_custom_call.1} parent=43 // pred_fallthru
        _
      // Predicated region
      $region57: #{tpu_custom_call.1} parent=43 // pred_check
        %p461 = pneg %p195
      $region58: #{tpu_custom_call.1} parent=43 // pred_check_branch
        %463 = sbr.rel (%p461) target = $region60
      $region59: #{tpu_custom_call.1} parent=43 // pred_region
        %p464 = scmp.lt.s32.totalorder %s23, 0
        %s465 = scalar_select %p464, %s23, 0
        %s466 = smul.addr %s465, 8
        %s467 = scalar_lea.vmem %s6, %s466
      $region60: #{tpu_custom_call.1} parent=43 // pred_fallthru
        _
    $region44: #{tpu_custom_call.1} parent=5 // pred_fallthru
      _
    %p468 = scmp.le.s32.totalorder 2, %s14
    // Predicated region
    $region61: #{tpu_custom_call.1} parent=5 // pred_check
      %p469 = pneg %p468
    $region62: #{tpu_custom_call.1} parent=5 // pred_check_branch
      %471 = sbr.rel (%p469) target = $region64
    $region63: #{tpu_custom_call.1} parent=5 // pred_region
      %s472 = ssub.s32 %s14, 2
    $region64: #{tpu_custom_call.1} parent=5 // pred_fallthru
      _
  $region6: #{tpu_custom_call.1} parent=0 // loop_footer
    %s18 = sadd.s32 1, %s14
  $region7: #{tpu_custom_call.1} parent=0 // loop_footer_branch
    %13 = sbr.rel target = $region3
  $region8: #{tpu_custom_call.1} parent=0 // loop_exit
    _

</llo_original>
